<compile_context>
chip_gen: v7x
topology: tpu7x:2x2x1
jax: 0.10.0
libtpu: 0.0.40
codegen_flags: <defaults>
</compile_context>

<pallas_src>
import functools

import jax
import jax.numpy as jnp
from jax.experimental import pallas as pl
from jax.experimental.pallas import tpu as pltpu

PAD = 128  # lane-friendly padded feature width for every layer


def _round_up(n, m):
    return (n + m - 1) // m * m


def _mlp5_kernel(x_ref, w_ref, b_ref, out_ref):
    """Fused 6-layer MLP on one batch tile.

    x_ref:   [TILE_B, 128] bf16  (zero-padded input features)
    w_ref:   [6, 128, 128] bf16  (per-layer transposed, zero-padded weights)
    b_ref:   [8, 128]      f32   (per-layer zero-padded biases, rows 0..5 used)
    out_ref: [TILE_B, 128] f32   (lane-dense; only column 0 is meaningful)
    """
    n_layers = w_ref.shape[0]
    h = x_ref[...]  # bf16
    for layer in range(n_layers):
        w = w_ref[layer]                 # [128, 128] bf16 (static leading index)
        b = b_ref[layer:layer + 1, :]    # [1, 128]   f32
        y = jnp.dot(h.astype(jnp.bfloat16), w,
                    preferred_element_type=jnp.float32) + b
        if layer < n_layers - 1:
            h = jnp.maximum(y, 0.0)      # ReLU in f32 on the VPU
        else:
            h = y                        # final layer: no activation
    out_ref[...] = h


def pack_params(params, pad=PAD):
    """Pack list of (W[in,out], b[out]) into one bf16 weight slab + one f32 bias slab."""
    n_layers = len(params)
    w_slab = jnp.zeros((n_layers, pad, pad), jnp.float32)
    b_rows = max(8, n_layers)  # keep sublane dim >= 8 for a clean VMEM tile
    b_slab = jnp.zeros((b_rows, pad), jnp.float32)
    for i, (w, b) in enumerate(params):
        fi, fo = w.shape
        w_slab = w_slab.at[i, :fi, :fo].set(w)
        b_slab = b_slab.at[i, :fo].set(b)
    return w_slab.astype(jnp.bfloat16), b_slab


@functools.partial(jax.jit, static_argnames=("tile_b",))
def mlp_5_layer_forward(x, params, tile_b=512):
    """x: [B, input_size] float32. params: list of (W_t, b) with W_t = [in, out]."""
    B, F = x.shape
    out_size = params[-1][0].shape[1]
    n_layers = len(params)

    w_slab, b_slab = pack_params(params)
    P = w_slab.shape[-1]

    tile_b = min(tile_b, _round_up(B, 8))
    b_pad = _round_up(B, tile_b)
    grid = (b_pad // tile_b,)

    # Zero-pad input to a lane-dense [B_pad, 128] bf16 slab (MXU eats bf16 anyway).
    x_pad = jnp.zeros((b_pad, P), jnp.bfloat16).at[:B, :F].set(x.astype(jnp.bfloat16))

    cost = pl.CostEstimate(
        flops=2 * b_pad * n_layers * P * P,
        transcendentals=0,
        bytes_accessed=(x_pad.size * 2 + w_slab.size * 2
                        + b_slab.size * 4 + b_pad * P * 4),
    )

    out_pad = pl.pallas_call(
        _mlp5_kernel,
        out_shape=jax.ShapeDtypeStruct((b_pad, P), jnp.float32),
        grid=grid,
        in_specs=[
            pl.BlockSpec((tile_b, P), lambda i: (i, 0)),             # x tile
            pl.BlockSpec((n_layers, P, P), lambda i: (0, 0, 0)),     # weights: resident
            pl.BlockSpec(b_slab.shape, lambda i: (0, 0)),            # biases:  resident
        ],
        out_specs=pl.BlockSpec((tile_b, P), lambda i: (i, 0)),
        compiler_params=pltpu.CompilerParams(
            dimension_semantics=("parallel",)),
        cost_estimate=cost,
    )(x_pad, w_slab, b_slab)

    return out_pad[:B, :out_size]


def init_params(key,
                input_size=63, hidden_dim1=75, hidden_dim2=125, hidden_dim3=100,
                hidden_dim4=80, hidden_dim5=64, output_size=1):
    """Deterministic init mirroring torch.nn.Linear's U(-1/sqrt(fan_in), 1/sqrt(fan_in)).

    Weights are stored transposed: [in_features, out_features].
    """
    dims = [input_size, hidden_dim1, hidden_dim2, hidden_dim3,
            hidden_dim4, hidden_dim5, output_size]
    params = []
    for i in range(len(dims) - 1):
        fan_in, fan_out = dims[i], dims[i + 1]
        key, kw, kb = jax.random.split(key, 3)
        bound = 1.0 / jnp.sqrt(jnp.float32(fan_in))
        w = jax.random.uniform(kw, (fan_in, fan_out), jnp.float32, -bound, bound)
        b = jax.random.uniform(kb, (fan_out,), jnp.float32, -bound, bound)
        params.append((w, b))
    return params


def reference_forward_f32(x, params):
    h = x
    for (w, b) in params[:-1]:
        h = jnp.maximum(h @ w + b, 0.0)
    w, b = params[-1]
    return h @ w + b


def reference_forward_bf16(x, params):
    """Mirrors the kernel's bf16-matmul / f32-accumulate numerics."""
    h = x.astype(jnp.bfloat16)
    for i, (w, b) in enumerate(params):
        y = jnp.dot(h.astype(jnp.bfloat16), w.astype(jnp.bfloat16),
                    preferred_element_type=jnp.float32) + b
        h = jnp.maximum(y, 0.0) if i < len(params) - 1 else y
    return h


if __name__ == "__main__":
    key = jax.random.PRNGKey(0)
    key, kx = jax.random.split(key)

    B, input_size = 8, 63
    x = jax.random.normal(kx, (B, input_size), jnp.float32)
    params = init_params(key, input_size=input_size)

    out = mlp_5_layer_forward(x, params)
    out = jax.block_until_ready(out)
    assert out.shape == (B, 1), out.shape

    # Tight check against a reference that uses the same bf16-in / f32-acc numerics.
    ref_bf16 = reference_forward_bf16(x, params)
    assert jnp.allclose(out, ref_bf16, atol=2e-3, rtol=2e-3), \
        f"bf16-matched max err {jnp.max(jnp.abs(out - ref_bf16))}"

    # Loose sanity check against the full-f32 reference (bf16 matmul inputs).
    ref_f32 = reference_forward_f32(x, params)
    assert jnp.allclose(out, ref_f32, atol=5e-2, rtol=5e-2), \
        f"f32 max err {jnp.max(jnp.abs(out - ref_f32))}"

    print("KERNEL_OK")
</pallas_src>

<mosaic_0001>
module attributes {stable_mosaic.version = 11 : i64} {
  func.func @_mlp5_kernel(%arg0: i32, %arg1: memref<8x128xbf16, #tpu.memory_space<vmem>>, %arg2: memref<6x128x128xbf16, #tpu.memory_space<vmem>>, %arg3: memref<8x128xf32, #tpu.memory_space<vmem>>, %arg4: memref<8x128xf32, #tpu.memory_space<vmem>>) attributes {dimension_semantics = [#tpu.dimension_semantics<parallel>], iteration_bounds = array<i64: 1>, scalar_prefetch = 0 : i64, scratch_operands = 0 : i64, tpu.core_type = #tpu.core_type<tc>, window_params = [{transform_indices = @transform_0, window_bounds = array<i64: 8, 128>}, {pipeline_mode = #tpu.pipeline_mode<synchronous>, transform_indices = @transform_1, window_bounds = array<i64: 6, 128, 128>}, {pipeline_mode = #tpu.pipeline_mode<synchronous>, transform_indices = @transform_2, window_bounds = array<i64: 8, 128>}, {transform_indices = @transform_3, window_bounds = array<i64: 8, 128>}]} {
    %c0 = arith.constant 0 : index
    %c0_0 = arith.constant 0 : index
    %0 = vector.load %arg1[%c0, %c0_0] : memref<8x128xbf16, #tpu.memory_space<vmem>>, vector<8x128xbf16>
    %c0_1 = arith.constant 0 : index
    %c0_2 = arith.constant 0 : index
    %c0_3 = arith.constant 0 : index
    %1 = vector.load %arg2[%c0_1, %c0_2, %c0_3] : memref<6x128x128xbf16, #tpu.memory_space<vmem>>, vector<1x128x128xbf16>
    %2 = vector.shape_cast %1 : vector<1x128x128xbf16> to vector<128x128xbf16>
    %c0_4 = arith.constant 0 : index
    %c0_5 = arith.constant 0 : index
    %3 = vector.load %arg3[%c0_4, %c0_5] : memref<8x128xf32, #tpu.memory_space<vmem>>, vector<1x128xf32>
    %cst = arith.constant dense<0.000000e+00> : vector<8x128xf32>
    %4 = tpu.matmul %0, %2, %cst {dimension_numbers = #tpu.dot_dimension_numbers<[1], [0], [0], [1], [0, 0, 1, 1], [], []>} : vector<8x128xbf16>, vector<128x128xbf16>, vector<8x128xf32> -> vector<8x128xf32>
    %5 = vector.broadcast %3 : vector<1x128xf32> to vector<8x128xf32>
    %6 = arith.addf %4, %5 : vector<8x128xf32>
    %cst_6 = arith.constant 0.000000e+00 : f32
    %7 = vector.broadcast %cst_6 : f32 to vector<8x128xf32>
    %8 = arith.maximumf %6, %7 : vector<8x128xf32>
    %c1 = arith.constant 1 : index
    %c0_7 = arith.constant 0 : index
    %c0_8 = arith.constant 0 : index
    %9 = vector.load %arg2[%c1, %c0_7, %c0_8] : memref<6x128x128xbf16, #tpu.memory_space<vmem>>, vector<1x128x128xbf16>
    %10 = vector.shape_cast %9 : vector<1x128x128xbf16> to vector<128x128xbf16>
    %c1_9 = arith.constant 1 : index
    %c0_10 = arith.constant 0 : index
    %11 = vector.load %arg3[%c1_9, %c0_10] : memref<8x128xf32, #tpu.memory_space<vmem>>, vector<1x128xf32>
    %12 = arith.truncf %8 : vector<8x128xf32> to vector<8x128xbf16>
    %cst_11 = arith.constant dense<0.000000e+00> : vector<8x128xf32>
    %13 = tpu.matmul %12, %10, %cst_11 {dimension_numbers = #tpu.dot_dimension_numbers<[1], [0], [0], [1], [0, 0, 1, 1], [], []>} : vector<8x128xbf16>, vector<128x128xbf16>, vector<8x128xf32> -> vector<8x128xf32>
    %14 = vector.broadcast %11 : vector<1x128xf32> to vector<8x128xf32>
    %15 = arith.addf %13, %14 : vector<8x128xf32>
    %cst_12 = arith.constant 0.000000e+00 : f32
    %16 = vector.broadcast %cst_12 : f32 to vector<8x128xf32>
    %17 = arith.maximumf %15, %16 : vector<8x128xf32>
    %c2 = arith.constant 2 : index
    %c0_13 = arith.constant 0 : index
    %c0_14 = arith.constant 0 : index
    %18 = vector.load %arg2[%c2, %c0_13, %c0_14] : memref<6x128x128xbf16, #tpu.memory_space<vmem>>, vector<1x128x128xbf16>
    %19 = vector.shape_cast %18 : vector<1x128x128xbf16> to vector<128x128xbf16>
    %c2_15 = arith.constant 2 : index
    %c0_16 = arith.constant 0 : index
    %20 = vector.load %arg3[%c2_15, %c0_16] : memref<8x128xf32, #tpu.memory_space<vmem>>, vector<1x128xf32>
    %21 = arith.truncf %17 : vector<8x128xf32> to vector<8x128xbf16>
    %cst_17 = arith.constant dense<0.000000e+00> : vector<8x128xf32>
    %22 = tpu.matmul %21, %19, %cst_17 {dimension_numbers = #tpu.dot_dimension_numbers<[1], [0], [0], [1], [0, 0, 1, 1], [], []>} : vector<8x128xbf16>, vector<128x128xbf16>, vector<8x128xf32> -> vector<8x128xf32>
    %23 = vector.broadcast %20 : vector<1x128xf32> to vector<8x128xf32>
    %24 = arith.addf %22, %23 : vector<8x128xf32>
    %cst_18 = arith.constant 0.000000e+00 : f32
    %25 = vector.broadcast %cst_18 : f32 to vector<8x128xf32>
    %26 = arith.maximumf %24, %25 : vector<8x128xf32>
    %c3 = arith.constant 3 : index
    %c0_19 = arith.constant 0 : index
    %c0_20 = arith.constant 0 : index
    %27 = vector.load %arg2[%c3, %c0_19, %c0_20] : memref<6x128x128xbf16, #tpu.memory_space<vmem>>, vector<1x128x128xbf16>
    %28 = vector.shape_cast %27 : vector<1x128x128xbf16> to vector<128x128xbf16>
    %c3_21 = arith.constant 3 : index
    %c0_22 = arith.constant 0 : index
    %29 = vector.load %arg3[%c3_21, %c0_22] : memref<8x128xf32, #tpu.memory_space<vmem>>, vector<1x128xf32>
    %30 = arith.truncf %26 : vector<8x128xf32> to vector<8x128xbf16>
    %cst_23 = arith.constant dense<0.000000e+00> : vector<8x128xf32>
    %31 = tpu.matmul %30, %28, %cst_23 {dimension_numbers = #tpu.dot_dimension_numbers<[1], [0], [0], [1], [0, 0, 1, 1], [], []>} : vector<8x128xbf16>, vector<128x128xbf16>, vector<8x128xf32> -> vector<8x128xf32>
    %32 = vector.broadcast %29 : vector<1x128xf32> to vector<8x128xf32>
    %33 = arith.addf %31, %32 : vector<8x128xf32>
    %cst_24 = arith.constant 0.000000e+00 : f32
    %34 = vector.broadcast %cst_24 : f32 to vector<8x128xf32>
    %35 = arith.maximumf %33, %34 : vector<8x128xf32>
    %c4 = arith.constant 4 : index
    %c0_25 = arith.constant 0 : index
    %c0_26 = arith.constant 0 : index
    %36 = vector.load %arg2[%c4, %c0_25, %c0_26] : memref<6x128x128xbf16, #tpu.memory_space<vmem>>, vector<1x128x128xbf16>
    %37 = vector.shape_cast %36 : vector<1x128x128xbf16> to vector<128x128xbf16>
    %c4_27 = arith.constant 4 : index
    %c0_28 = arith.constant 0 : index
    %38 = vector.load %arg3[%c4_27, %c0_28] : memref<8x128xf32, #tpu.memory_space<vmem>>, vector<1x128xf32>
    %39 = arith.truncf %35 : vector<8x128xf32> to vector<8x128xbf16>
    %cst_29 = arith.constant dense<0.000000e+00> : vector<8x128xf32>
    %40 = tpu.matmul %39, %37, %cst_29 {dimension_numbers = #tpu.dot_dimension_numbers<[1], [0], [0], [1], [0, 0, 1, 1], [], []>} : vector<8x128xbf16>, vector<128x128xbf16>, vector<8x128xf32> -> vector<8x128xf32>
    %41 = vector.broadcast %38 : vector<1x128xf32> to vector<8x128xf32>
    %42 = arith.addf %40, %41 : vector<8x128xf32>
    %cst_30 = arith.constant 0.000000e+00 : f32
    %43 = vector.broadcast %cst_30 : f32 to vector<8x128xf32>
    %44 = arith.maximumf %42, %43 : vector<8x128xf32>
    %c5 = arith.constant 5 : index
    %c0_31 = arith.constant 0 : index
    %c0_32 = arith.constant 0 : index
    %45 = vector.load %arg2[%c5, %c0_31, %c0_32] : memref<6x128x128xbf16, #tpu.memory_space<vmem>>, vector<1x128x128xbf16>
    %46 = vector.shape_cast %45 : vector<1x128x128xbf16> to vector<128x128xbf16>
    %c5_33 = arith.constant 5 : index
    %c0_34 = arith.constant 0 : index
    %47 = vector.load %arg3[%c5_33, %c0_34] : memref<8x128xf32, #tpu.memory_space<vmem>>, vector<1x128xf32>
    %48 = arith.truncf %44 : vector<8x128xf32> to vector<8x128xbf16>
    %cst_35 = arith.constant dense<0.000000e+00> : vector<8x128xf32>
    %49 = tpu.matmul %48, %46, %cst_35 {dimension_numbers = #tpu.dot_dimension_numbers<[1], [0], [0], [1], [0, 0, 1, 1], [], []>} : vector<8x128xbf16>, vector<128x128xbf16>, vector<8x128xf32> -> vector<8x128xf32>
    %50 = vector.broadcast %47 : vector<1x128xf32> to vector<8x128xf32>
    %51 = arith.addf %49, %50 : vector<8x128xf32>
    %c0_36 = arith.constant 0 : index
    %c0_37 = arith.constant 0 : index
    %52 = vector.load %arg4[%c0_36, %c0_37] : memref<8x128xf32, #tpu.memory_space<vmem>>, vector<8x128xf32>
    tpu.vector_store %arg4[%c0_36, %c0_37], %51 {strides = array<i32>} : memref<8x128xf32, #tpu.memory_space<vmem>>, vector<8x128xf32>,
    return
  }
  func.func @transform_0(%arg0: i32) -> (i32, i32) {
    %c0_i32 = arith.constant 0 : i32
    %c0_i32_0 = arith.constant 0 : i32
    return %arg0, %c0_i32 : i32, i32
  }
  func.func @transform_1(%arg0: i32) -> (i32, i32, i32) {
    %c0_i32 = arith.constant 0 : i32
    %c0_i32_0 = arith.constant 0 : i32
    %c0_i32_1 = arith.constant 0 : i32
    %c0_i32_2 = arith.constant 0 : i32
    return %c0_i32, %c0_i32_0, %c0_i32_1 : i32, i32, i32
  }
  func.func @transform_2(%arg0: i32) -> (i32, i32) {
    %c0_i32 = arith.constant 0 : i32
    %c0_i32_0 = arith.constant 0 : i32
    %c0_i32_1 = arith.constant 0 : i32
    return %c0_i32, %c0_i32_0 : i32, i32
  }
  func.func @transform_3(%arg0: i32) -> (i32, i32) {
    %c0_i32 = arith.constant 0 : i32
    %c0_i32_0 = arith.constant 0 : i32
    return %arg0, %c0_i32 : i32, i32
  }
}

</mosaic_0001>

<llo_original>
// kernel: mlp_5_layer_forward.1
$region0: #{mlp_5_layer_forward.1}
  #allocation0 [shape = 'u32[]', space=smem, size = 0x4, offset = 0x4, fixed_abs, tag = 'smem constant byte address 0x4 - core index']
  #allocation1 [shape = 'u32[144,128]{1,0:T(1,128)}', space=vmem, size = 0x12000, scoped, tag = 'internal scratch']
  %s0 = inlined_call_operand.vmem [shape: bf16[8,128], index: 0, kind: input, shape index: {}]
  %s1 = inlined_call_operand.vmem [shape: bf16[6,128,128], index: 1, kind: input, shape index: {}]
  %s2 = inlined_call_operand.vmem [shape: f32[8,128], index: 2, kind: input, shape index: {}]
  %s3 = inlined_call_operand.vmem [shape: f32[8,128], index: 3, kind: output, shape index: {}]
  %s4 = sld [smem:[#allocation0]]
  $region22: #{mlp_5_layer_forward.1} parent=0
    _
  %s6 = ssub.s32 1, %s4
  %s7 = scalar_select 0, %s6, %s4
  // Predicated region
  $region2: #{mlp_5_layer_forward.1} parent=0 // pred_check
    _
  $region3: #{mlp_5_layer_forward.1} parent=0 // pred_check_branch
    %9 = sbr.rel (0) target = $region5
  $region4: #{mlp_5_layer_forward.1} parent=0 // pred_region
    _
  $region5: #{mlp_5_layer_forward.1} parent=0 // pred_fallthru
    _
  // Predicated region
  $region6: #{mlp_5_layer_forward.1} parent=0 // pred_check
    _
  $region7: #{mlp_5_layer_forward.1} parent=0 // pred_check_branch
    %11 = sbr.rel (0) target = $region9
  $region8: #{mlp_5_layer_forward.1} parent=0 // pred_region
    _
  $region9: #{mlp_5_layer_forward.1} parent=0 // pred_fallthru
    _
  // Predicated region
  $region10: #{mlp_5_layer_forward.1} parent=0 // pred_check
    _
  $region11: #{mlp_5_layer_forward.1} parent=0 // pred_check_branch
    %13 = sbr.rel (0) target = $region13
  $region12: #{mlp_5_layer_forward.1} parent=0 // pred_region
    _
  $region13: #{mlp_5_layer_forward.1} parent=0 // pred_fallthru
    _
  %v15 = vld [vmem:[%s0] sm:$0xf]
  %v16 = vld [vmem:[%s1] sm:$0xf]
  %v17 = vld [vmem:[%s1 + $0x4] sm:$0xf]
  %v18 = vld [vmem:[%s1 + $0x8] sm:$0xf]
  %v19 = vld [vmem:[%s1 + $0xc] sm:$0xf]
  %v20 = vld [vmem:[%s1 + $0x10] sm:$0xf]
  %v21 = vld [vmem:[%s1 + $0x14] sm:$0xf]
  %v22 = vld [vmem:[%s1 + $0x18] sm:$0xf]
  %v23 = vld [vmem:[%s1 + $0x1c] sm:$0xf]
  %v24 = vld [vmem:[%s1 + $0x20] sm:$0xf]
  %v25 = vld [vmem:[%s1 + $0x24] sm:$0xf]
  %v26 = vld [vmem:[%s1 + $0x28] sm:$0xf]
  %v27 = vld [vmem:[%s1 + $0x2c] sm:$0xf]
  %v28 = vld [vmem:[%s1 + $0x30] sm:$0xf]
  %v29 = vld [vmem:[%s1 + $0x34] sm:$0xf]
  %v30 = vld [vmem:[%s1 + $0x38] sm:$0xf]
  %v31 = vld [vmem:[%s1 + $0x3c] sm:$0xf]
  %v32 = vld [vmem:[%s2] sm:$0x1]
  %v33 = vlaneseq
  %v34 = vshrl.u32 %v33, 7
  %v35 = vsub.s32 0, %v34
  %v36 = vrot.slane %v32, %v35
  %v53 = vunpack.c.l.b16 %v16
  %v54 = vunpack.c.l.b16 %v17
  %v55 = vunpack.c.l.b16 %v18
  %v56 = vunpack.c.l.b16 %v19
  %v57 = vunpack.c.l.b16 %v20
  %v58 = vunpack.c.l.b16 %v21
  %v59 = vunpack.c.l.b16 %v22
  %v60 = vunpack.c.l.b16 %v23
  %v61 = vunpack.c.l.b16 %v24
  %v62 = vunpack.c.l.b16 %v25
  %v63 = vunpack.c.l.b16 %v26
  %v64 = vunpack.c.l.b16 %v27
  %v65 = vunpack.c.l.b16 %v28
  %v66 = vunpack.c.l.b16 %v29
  %v67 = vunpack.c.l.b16 %v30
  %v68 = vunpack.c.l.b16 %v31
  %v69 = vpack.c.b16 %v54, %v53
  %v70 = vpack.c.b16 %v56, %v55
  %v71 = vpack.c.b16 %v58, %v57
  %v72 = vpack.c.b16 %v60, %v59
  %v73 = vpack.c.b16 %v62, %v61
  %v74 = vpack.c.b16 %v64, %v63
  %v75 = vpack.c.b16 %v66, %v65
  %v76 = vpack.c.b16 %v68, %v67
  %85 = vmatprep.subr.bf16.mxu0 0
  %86 = vmatpush1.bf16.msra.mxu0 %v69
  %87 = vmatprep.subr.bf16.mxu0 0
  %88 = vmatpush1.bf16.msra.mxu0 %v70
  %89 = vmatprep.subr.bf16.mxu0 0
  %90 = vmatpush1.bf16.msra.mxu0 %v71
  %91 = vmatprep.subr.bf16.mxu0 0
  %92 = vmatpush1.bf16.msra.mxu0 %v72
  %93 = vmatprep.subr.bf16.mxu0 0
  %94 = vmatpush1.bf16.msra.mxu0 %v73
  %95 = vmatprep.subr.bf16.mxu0 0
  %96 = vmatpush1.bf16.msra.mxu0 %v74
  %97 = vmatprep.subr.bf16.mxu0 0
  %98 = vmatpush1.bf16.msra.mxu0 %v75
  %99 = vmatprep.subr.bf16.mxu0 0
  %100 = vmatpush1.bf16.msra.mxu0 %v76
  %101 = vmatprep.subr.bf16.mxu0 0
  %102 = vmatpush1.bf16.msra.mxu0 0
  %103 = vmatprep.subr.bf16.mxu0 0
  %104 = vmatpush1.bf16.msra.mxu0 0
  %105 = vmatprep.subr.bf16.mxu0 0
  %106 = vmatpush1.bf16.msra.mxu0 0
  %107 = vmatprep.subr.bf16.mxu0 0
  %108 = vmatpush1.bf16.msra.mxu0 0
  %109 = vmatprep.subr.bf16.mxu0 0
  %110 = vmatpush1.bf16.msra.mxu0 0
  %111 = vmatprep.subr.bf16.mxu0 0
  %112 = vmatpush1.bf16.msra.mxu0 0
  %113 = vmatprep.subr.bf16.mxu0 0
  %114 = vmatpush1.bf16.msra.mxu0 0
  %115 = vmatprep.subr.bf16.mxu0 0
  %116 = vmatpush1.bf16.msra.mxu0 0
  %117 = vmatprep.mubr.bf16.mxu0 0
  %118 = vmatmul.mubr.bf16.gmra.mrb[0].mxu0 %v15
  %v119 = vpop.f32.mrb[0].mxu0
  %v120 = vadd.f32 %v36, %v119
  %v121 = vpop.f32.mrb[0].mxu0
  %v122 = vpop.f32.mrb[0].mxu0
  %v123 = vpop.f32.mrb[0].mxu0
  %124 = vdwg.mxu0
  %v125 = vmax.f32 %v120, 0.0
  %s126 = scalar_lea.vmem %s1, 64
  %v127 = vld [vmem:[%s126] sm:$0xf]
  %v128 = vld [vmem:[%s126 + $0x4] sm:$0xf]
  %v129 = vld [vmem:[%s126 + $0x8] sm:$0xf]
  %v130 = vld [vmem:[%s126 + $0xc] sm:$0xf]
  %v131 = vld [vmem:[%s126 + $0x10] sm:$0xf]
  %v132 = vld [vmem:[%s126 + $0x14] sm:$0xf]
  %v133 = vld [vmem:[%s126 + $0x18] sm:$0xf]
  %v134 = vld [vmem:[%s126 + $0x1c] sm:$0xf]
  %v135 = vld [vmem:[%s126 + $0x20] sm:$0xf]
  %v136 = vld [vmem:[%s126 + $0x24] sm:$0xf]
  %v137 = vld [vmem:[%s126 + $0x28] sm:$0xf]
  %v138 = vld [vmem:[%s126 + $0x2c] sm:$0xf]
  %v139 = vld [vmem:[%s126 + $0x30] sm:$0xf]
  %v140 = vld [vmem:[%s126 + $0x34] sm:$0xf]
  %v141 = vld [vmem:[%s126 + $0x38] sm:$0xf]
  %v142 = vld [vmem:[%s126 + $0x3c] sm:$0xf]
  %v143 = vld [vmem:[%s2 + $0x1] sm:$0x1]
  %v144 = vpack.c.bf16 %v125, %v125
  %v145 = vlaneseq
  %v146 = vshrl.u32 %v145, 7
  %v147 = vsub.s32 0, %v146
  %v148 = vrot.slane %v143, %v147
  %v165 = vunpack.c.l.b16 %v127
  %v166 = vunpack.c.l.b16 %v128
  %v167 = vunpack.c.l.b16 %v129
  %v168 = vunpack.c.l.b16 %v130
  %v169 = vunpack.c.l.b16 %v131
  %v170 = vunpack.c.l.b16 %v132
  %v171 = vunpack.c.l.b16 %v133
  %v172 = vunpack.c.l.b16 %v134
  %v173 = vunpack.c.l.b16 %v135
  %v174 = vunpack.c.l.b16 %v136
  %v175 = vunpack.c.l.b16 %v137
  %v176 = vunpack.c.l.b16 %v138
  %v177 = vunpack.c.l.b16 %v139
  %v178 = vunpack.c.l.b16 %v140
  %v179 = vunpack.c.l.b16 %v141
  %v180 = vunpack.c.l.b16 %v142
  %v181 = vpack.c.b16 %v166, %v165
  %v182 = vpack.c.b16 %v168, %v167
  %v183 = vpack.c.b16 %v170, %v169
  %v184 = vpack.c.b16 %v172, %v171
  %v185 = vpack.c.b16 %v174, %v173
  %v186 = vpack.c.b16 %v176, %v175
  %v187 = vpack.c.b16 %v178, %v177
  %v188 = vpack.c.b16 %v180, %v179
  %197 = vmatprep.subr.bf16.mxu0 0
  %198 = vmatpush1.bf16.msra.mxu0 %v181
  %199 = vmatprep.subr.bf16.mxu0 0
  %200 = vmatpush1.bf16.msra.mxu0 %v182
  %201 = vmatprep.subr.bf16.mxu0 0
  %202 = vmatpush1.bf16.msra.mxu0 %v183
  %203 = vmatprep.subr.bf16.mxu0 0
  %204 = vmatpush1.bf16.msra.mxu0 %v184
  %205 = vmatprep.subr.bf16.mxu0 0
  %206 = vmatpush1.bf16.msra.mxu0 %v185
  %207 = vmatprep.subr.bf16.mxu0 0
  %208 = vmatpush1.bf16.msra.mxu0 %v186
  %209 = vmatprep.subr.bf16.mxu0 0
  %210 = vmatpush1.bf16.msra.mxu0 %v187
  %211 = vmatprep.subr.bf16.mxu0 0
  %212 = vmatpush1.bf16.msra.mxu0 %v188
  %213 = vmatprep.subr.bf16.mxu0 0
  %214 = vmatpush1.bf16.msra.mxu0 0
  %215 = vmatprep.subr.bf16.mxu0 0
  %216 = vmatpush1.bf16.msra.mxu0 0
  %217 = vmatprep.subr.bf16.mxu0 0
  %218 = vmatpush1.bf16.msra.mxu0 0
  %219 = vmatprep.subr.bf16.mxu0 0
  %220 = vmatpush1.bf16.msra.mxu0 0
  %221 = vmatprep.subr.bf16.mxu0 0
  %222 = vmatpush1.bf16.msra.mxu0 0
  %223 = vmatprep.subr.bf16.mxu0 0
  %224 = vmatpush1.bf16.msra.mxu0 0
  %225 = vmatprep.subr.bf16.mxu0 0
  %226 = vmatpush1.bf16.msra.mxu0 0
  %227 = vmatprep.subr.bf16.mxu0 0
  %228 = vmatpush1.bf16.msra.mxu0 0
  %229 = vmatprep.mubr.bf16.mxu0 0
  %230 = vmatmul.mubr.bf16.gmra.mrb[0].mxu0 %v144
  %v231 = vpop.f32.mrb[0].mxu0
  %v232 = vadd.f32 %v148, %v231
  %v233 = vpop.f32.mrb[0].mxu0
  %v234 = vpop.f32.mrb[0].mxu0
  %v235 = vpop.f32.mrb[0].mxu0
  %236 = vdwg.mxu0
  %v237 = vmax.f32 %v232, 0.0
  %s238 = scalar_lea.vmem %s1, 128
  %v239 = vld [vmem:[%s238] sm:$0xf]
  %v240 = vld [vmem:[%s238 + $0x4] sm:$0xf]
  %v241 = vld [vmem:[%s238 + $0x8] sm:$0xf]
  %v242 = vld [vmem:[%s238 + $0xc] sm:$0xf]
  %v243 = vld [vmem:[%s238 + $0x10] sm:$0xf]
  %v244 = vld [vmem:[%s238 + $0x14] sm:$0xf]
  %v245 = vld [vmem:[%s238 + $0x18] sm:$0xf]
  %v246 = vld [vmem:[%s238 + $0x1c] sm:$0xf]
  %v247 = vld [vmem:[%s238 + $0x20] sm:$0xf]
  %v248 = vld [vmem:[%s238 + $0x24] sm:$0xf]
  %v249 = vld [vmem:[%s238 + $0x28] sm:$0xf]
  %v250 = vld [vmem:[%s238 + $0x2c] sm:$0xf]
  %v251 = vld [vmem:[%s238 + $0x30] sm:$0xf]
  %v252 = vld [vmem:[%s238 + $0x34] sm:$0xf]
  %v253 = vld [vmem:[%s238 + $0x38] sm:$0xf]
  %v254 = vld [vmem:[%s238 + $0x3c] sm:$0xf]
  %v255 = vld [vmem:[%s2 + $0x2] sm:$0x1]
  %v256 = vpack.c.bf16 %v237, %v237
  %v257 = vlaneseq
  %v258 = vshrl.u32 %v257, 7
  %v259 = vsub.s32 0, %v258
  %v260 = vrot.slane %v255, %v259
  %v277 = vunpack.c.l.b16 %v239
  %v278 = vunpack.c.l.b16 %v240
  %v279 = vunpack.c.l.b16 %v241
  %v280 = vunpack.c.l.b16 %v242
  %v281 = vunpack.c.l.b16 %v243
  %v282 = vunpack.c.l.b16 %v244
  %v283 = vunpack.c.l.b16 %v245
  %v284 = vunpack.c.l.b16 %v246
  %v285 = vunpack.c.l.b16 %v247
  %v286 = vunpack.c.l.b16 %v248
  %v287 = vunpack.c.l.b16 %v249
  %v288 = vunpack.c.l.b16 %v250
  %v289 = vunpack.c.l.b16 %v251
  %v290 = vunpack.c.l.b16 %v252
  %v291 = vunpack.c.l.b16 %v253
  %v292 = vunpack.c.l.b16 %v254
  %v293 = vpack.c.b16 %v278, %v277
  %v294 = vpack.c.b16 %v280, %v279
  %v295 = vpack.c.b16 %v282, %v281
  %v296 = vpack.c.b16 %v284, %v283
  %v297 = vpack.c.b16 %v286, %v285
  %v298 = vpack.c.b16 %v288, %v287
  %v299 = vpack.c.b16 %v290, %v289
  %v300 = vpack.c.b16 %v292, %v291
  %309 = vmatprep.subr.bf16.mxu0 0
  %310 = vmatpush1.bf16.msra.mxu0 %v293
  %311 = vmatprep.subr.bf16.mxu0 0
  %312 = vmatpush1.bf16.msra.mxu0 %v294
  %313 = vmatprep.subr.bf16.mxu0 0
  %314 = vmatpush1.bf16.msra.mxu0 %v295
  %315 = vmatprep.subr.bf16.mxu0 0
  %316 = vmatpush1.bf16.msra.mxu0 %v296
  %317 = vmatprep.subr.bf16.mxu0 0
  %318 = vmatpush1.bf16.msra.mxu0 %v297
  %319 = vmatprep.subr.bf16.mxu0 0
  %320 = vmatpush1.bf16.msra.mxu0 %v298
  %321 = vmatprep.subr.bf16.mxu0 0
  %322 = vmatpush1.bf16.msra.mxu0 %v299
  %323 = vmatprep.subr.bf16.mxu0 0
  %324 = vmatpush1.bf16.msra.mxu0 %v300
  %325 = vmatprep.subr.bf16.mxu0 0
  %326 = vmatpush1.bf16.msra.mxu0 0
  %327 = vmatprep.subr.bf16.mxu0 0
  %328 = vmatpush1.bf16.msra.mxu0 0
  %329 = vmatprep.subr.bf16.mxu0 0
  %330 = vmatpush1.bf16.msra.mxu0 0
  %331 = vmatprep.subr.bf16.mxu0 0
  %332 = vmatpush1.bf16.msra.mxu0 0
  %333 = vmatprep.subr.bf16.mxu0 0
  %334 = vmatpush1.bf16.msra.mxu0 0
  %335 = vmatprep.subr.bf16.mxu0 0
  %336 = vmatpush1.bf16.msra.mxu0 0
  %337 = vmatprep.subr.bf16.mxu0 0
  %338 = vmatpush1.bf16.msra.mxu0 0
  %339 = vmatprep.subr.bf16.mxu0 0
  %340 = vmatpush1.bf16.msra.mxu0 0
  %341 = vmatprep.mubr.bf16.mxu0 0
  %342 = vmatmul.mubr.bf16.gmra.mrb[0].mxu0 %v256
  %v343 = vpop.f32.mrb[0].mxu0
  %v344 = vadd.f32 %v260, %v343
  %v345 = vpop.f32.mrb[0].mxu0
  %v346 = vpop.f32.mrb[0].mxu0
  %v347 = vpop.f32.mrb[0].mxu0
  %348 = vdwg.mxu0
  %v349 = vmax.f32 %v344, 0.0
  %s350 = scalar_lea.vmem %s1, 192
  %v351 = vld [vmem:[%s350] sm:$0xf]
  %v352 = vld [vmem:[%s350 + $0x4] sm:$0xf]
  %v353 = vld [vmem:[%s350 + $0x8] sm:$0xf]
  %v354 = vld [vmem:[%s350 + $0xc] sm:$0xf]
  %v355 = vld [vmem:[%s350 + $0x10] sm:$0xf]
  %v356 = vld [vmem:[%s350 + $0x14] sm:$0xf]
  %v357 = vld [vmem:[%s350 + $0x18] sm:$0xf]
  %v358 = vld [vmem:[%s350 + $0x1c] sm:$0xf]
  %v359 = vld [vmem:[%s350 + $0x20] sm:$0xf]
  %v360 = vld [vmem:[%s350 + $0x24] sm:$0xf]
  %v361 = vld [vmem:[%s350 + $0x28] sm:$0xf]
  %v362 = vld [vmem:[%s350 + $0x2c] sm:$0xf]
  %v363 = vld [vmem:[%s350 + $0x30] sm:$0xf]
  %v364 = vld [vmem:[%s350 + $0x34] sm:$0xf]
  %v365 = vld [vmem:[%s350 + $0x38] sm:$0xf]
  %v366 = vld [vmem:[%s350 + $0x3c] sm:$0xf]
  %v367 = vld [vmem:[%s2 + $0x3] sm:$0x1]
  %v368 = vpack.c.bf16 %v349, %v349
  %v369 = vlaneseq
  %v370 = vshrl.u32 %v369, 7
  %v371 = vsub.s32 0, %v370
  %v372 = vrot.slane %v367, %v371
  %v389 = vunpack.c.l.b16 %v351
  %v390 = vunpack.c.l.b16 %v352
  %v391 = vunpack.c.l.b16 %v353
  %v392 = vunpack.c.l.b16 %v354
  %v393 = vunpack.c.l.b16 %v355
  %v394 = vunpack.c.l.b16 %v356
  %v395 = vunpack.c.l.b16 %v357
  %v396 = vunpack.c.l.b16 %v358
  %v397 = vunpack.c.l.b16 %v359
  %v398 = vunpack.c.l.b16 %v360
  %v399 = vunpack.c.l.b16 %v361
  %v400 = vunpack.c.l.b16 %v362
  %v401 = vunpack.c.l.b16 %v363
  %v402 = vunpack.c.l.b16 %v364
  %v403 = vunpack.c.l.b16 %v365
  %v404 = vunpack.c.l.b16 %v366
  %v405 = vpack.c.b16 %v390, %v389
  %v406 = vpack.c.b16 %v392, %v391
  %v407 = vpack.c.b16 %v394, %v393
  %v408 = vpack.c.b16 %v396, %v395
  %v409 = vpack.c.b16 %v398, %v397
  %v410 = vpack.c.b16 %v400, %v399
  %v411 = vpack.c.b16 %v402, %v401
  %v412 = vpack.c.b16 %v404, %v403
  %421 = vmatprep.subr.bf16.mxu0 0
  %422 = vmatpush1.bf16.msra.mxu0 %v405
  %423 = vmatprep.subr.bf16.mxu0 0
  %424 = vmatpush1.bf16.msra.mxu0 %v406
  %425 = vmatprep.subr.bf16.mxu0 0
  %426 = vmatpush1.bf16.msra.mxu0 %v407
  %427 = vmatprep.subr.bf16.mxu0 0
  %428 = vmatpush1.bf16.msra.mxu0 %v408
  %429 = vmatprep.subr.bf16.mxu0 0
  %430 = vmatpush1.bf16.msra.mxu0 %v409
  %431 = vmatprep.subr.bf16.mxu0 0
  %432 = vmatpush1.bf16.msra.mxu0 %v410
  %433 = vmatprep.subr.bf16.mxu0 0
  %434 = vmatpush1.bf16.msra.mxu0 %v411
  %435 = vmatprep.subr.bf16.mxu0 0
  %436 = vmatpush1.bf16.msra.mxu0 %v412
  %437 = vmatprep.subr.bf16.mxu0 0
  %438 = vmatpush1.bf16.msra.mxu0 0
  %439 = vmatprep.subr.bf16.mxu0 0
  %440 = vmatpush1.bf16.msra.mxu0 0
  %441 = vmatprep.subr.bf16.mxu0 0
  %442 = vmatpush1.bf16.msra.mxu0 0
  %443 = vmatprep.subr.bf16.mxu0 0
  %444 = vmatpush1.bf16.msra.mxu0 0
  %445 = vmatprep.subr.bf16.mxu0 0
  %446 = vmatpush1.bf16.msra.mxu0 0
  %447 = vmatprep.subr.bf16.mxu0 0
  %448 = vmatpush1.bf16.msra.mxu0 0
  %449 = vmatprep.subr.bf16.mxu0 0
  %450 = vmatpush1.bf16.msra.mxu0 0
  %451 = vmatprep.subr.bf16.mxu0 0
  %452 = vmatpush1.bf16.msra.mxu0 0
  %453 = vmatprep.mubr.bf16.mxu0 0
  %454 = vmatmul.mubr.bf16.gmra.mrb[0].mxu0 %v368
  %v455 = vpop.f32.mrb[0].mxu0
  %v456 = vadd.f32 %v372, %v455
  %v457 = vpop.f32.mrb[0].mxu0
  %v458 = vpop.f32.mrb[0].mxu0
  %v459 = vpop.f32.mrb[0].mxu0
  %460 = vdwg.mxu0
  %v461 = vmax.f32 %v456, 0.0
  %s462 = scalar_lea.vmem %s1, 256
  %v463 = vld [vmem:[%s462] sm:$0xf]
  %v464 = vld [vmem:[%s462 + $0x4] sm:$0xf]
  %v465 = vld [vmem:[%s462 + $0x8] sm:$0xf]
  %v466 = vld [vmem:[%s462 + $0xc] sm:$0xf]
  %v467 = vld [vmem:[%s462 + $0x10] sm:$0xf]
  %v468 = vld [vmem:[%s462 + $0x14] sm:$0xf]
  %v469 = vld [vmem:[%s462 + $0x18] sm:$0xf]
  %v470 = vld [vmem:[%s462 + $0x1c] sm:$0xf]
  %v471 = vld [vmem:[%s462 + $0x20] sm:$0xf]
  %v472 = vld [vmem:[%s462 + $0x24] sm:$0xf]
  %v473 = vld [vmem:[%s462 + $0x28] sm:$0xf]
  %v474 = vld [vmem:[%s462 + $0x2c] sm:$0xf]
  %v475 = vld [vmem:[%s462 + $0x30] sm:$0xf]
  %v476 = vld [vmem:[%s462 + $0x34] sm:$0xf]
  %v477 = vld [vmem:[%s462 + $0x38] sm:$0xf]
  %v478 = vld [vmem:[%s462 + $0x3c] sm:$0xf]
  %v479 = vld [vmem:[%s2 + $0x4] sm:$0x1]
  %v480 = vpack.c.bf16 %v461, %v461
  %v481 = vlaneseq
  %v482 = vshrl.u32 %v481, 7
  %v483 = vsub.s32 0, %v482
  %v484 = vrot.slane %v479, %v483
  %v501 = vunpack.c.l.b16 %v463
  %v502 = vunpack.c.l.b16 %v464
  %v503 = vunpack.c.l.b16 %v465
  %v504 = vunpack.c.l.b16 %v466
  %v505 = vunpack.c.l.b16 %v467
  %v506 = vunpack.c.l.b16 %v468
  %v507 = vunpack.c.l.b16 %v469
  %v508 = vunpack.c.l.b16 %v470
  %v509 = vunpack.c.l.b16 %v471
  %v510 = vunpack.c.l.b16 %v472
  %v511 = vunpack.c.l.b16 %v473
  %v512 = vunpack.c.l.b16 %v474
  %v513 = vunpack.c.l.b16 %v475
  %v514 = vunpack.c.l.b16 %v476
  %v515 = vunpack.c.l.b16 %v477
  %v516 = vunpack.c.l.b16 %v478
  %v517 = vpack.c.b16 %v502, %v501
  %v518 = vpack.c.b16 %v504, %v503
  %v519 = vpack.c.b16 %v506, %v505
  %v520 = vpack.c.b16 %v508, %v507
  %v521 = vpack.c.b16 %v510, %v509
  %v522 = vpack.c.b16 %v512, %v511
  %v523 = vpack.c.b16 %v514, %v513
  %v524 = vpack.c.b16 %v516, %v515
  %533 = vmatprep.subr.bf16.mxu0 0
  %534 = vmatpush1.bf16.msra.mxu0 %v517
  %535 = vmatprep.subr.bf16.mxu0 0
  %536 = vmatpush1.bf16.msra.mxu0 %v518
  %537 = vmatprep.subr.bf16.mxu0 0
  %538 = vmatpush1.bf16.msra.mxu0 %v519
  %539 = vmatprep.subr.bf16.mxu0 0
  %540 = vmatpush1.bf16.msra.mxu0 %v520
  %541 = vmatprep.subr.bf16.mxu0 0
  %542 = vmatpush1.bf16.msra.mxu0 %v521
  %543 = vmatprep.subr.bf16.mxu0 0
  %544 = vmatpush1.bf16.msra.mxu0 %v522
  %545 = vmatprep.subr.bf16.mxu0 0
  %546 = vmatpush1.bf16.msra.mxu0 %v523
  %547 = vmatprep.subr.bf16.mxu0 0
  %548 = vmatpush1.bf16.msra.mxu0 %v524
  %549 = vmatprep.subr.bf16.mxu0 0
  %550 = vmatpush1.bf16.msra.mxu0 0
  %551 = vmatprep.subr.bf16.mxu0 0
  %552 = vmatpush1.bf16.msra.mxu0 0
  %553 = vmatprep.subr.bf16.mxu0 0
  %554 = vmatpush1.bf16.msra.mxu0 0
  %555 = vmatprep.subr.bf16.mxu0 0
  %556 = vmatpush1.bf16.msra.mxu0 0
  %557 = vmatprep.subr.bf16.mxu0 0
  %558 = vmatpush1.bf16.msra.mxu0 0
  %559 = vmatprep.subr.bf16.mxu0 0
  %560 = vmatpush1.bf16.msra.mxu0 0
  %561 = vmatprep.subr.bf16.mxu0 0
  %562 = vmatpush1.bf16.msra.mxu0 0
  %563 = vmatprep.subr.bf16.mxu0 0
  %564 = vmatpush1.bf16.msra.mxu0 0
  %565 = vmatprep.mubr.bf16.mxu0 0
  %566 = vmatmul.mubr.bf16.gmra.mrb[0].mxu0 %v480
  %v567 = vpop.f32.mrb[0].mxu0
  %v568 = vadd.f32 %v484, %v567
  %v569 = vpop.f32.mrb[0].mxu0
  %v570 = vpop.f32.mrb[0].mxu0
  %v571 = vpop.f32.mrb[0].mxu0
  %572 = vdwg.mxu0
  %v573 = vmax.f32 %v568, 0.0
  %s574 = scalar_lea.vmem %s1, 320
  %v575 = vld [vmem:[%s574] sm:$0xf]
  %v576 = vld [vmem:[%s574 + $0x4] sm:$0xf]
  %v577 = vld [vmem:[%s574 + $0x8] sm:$0xf]
  %v578 = vld [vmem:[%s574 + $0xc] sm:$0xf]
  %v579 = vld [vmem:[%s574 + $0x10] sm:$0xf]
  %v580 = vld [vmem:[%s574 + $0x14] sm:$0xf]
  %v581 = vld [vmem:[%s574 + $0x18] sm:$0xf]
  %v582 = vld [vmem:[%s574 + $0x1c] sm:$0xf]
  %v583 = vld [vmem:[%s574 + $0x20] sm:$0xf]
  %v584 = vld [vmem:[%s574 + $0x24] sm:$0xf]
  %v585 = vld [vmem:[%s574 + $0x28] sm:$0xf]
  %v586 = vld [vmem:[%s574 + $0x2c] sm:$0xf]
  %v587 = vld [vmem:[%s574 + $0x30] sm:$0xf]
  %v588 = vld [vmem:[%s574 + $0x34] sm:$0xf]
  %v589 = vld [vmem:[%s574 + $0x38] sm:$0xf]
  %v590 = vld [vmem:[%s574 + $0x3c] sm:$0xf]
  %v591 = vld [vmem:[%s2 + $0x5] sm:$0x1]
  %v592 = vpack.c.bf16 %v573, %v573
  %v593 = vlaneseq
  %v594 = vshrl.u32 %v593, 7
  %v595 = vsub.s32 0, %v594
  %v596 = vrot.slane %v591, %v595
  %v613 = vunpack.c.l.b16 %v575
  %v614 = vunpack.c.l.b16 %v576
  %v615 = vunpack.c.l.b16 %v577
  %v616 = vunpack.c.l.b16 %v578
  %v617 = vunpack.c.l.b16 %v579
  %v618 = vunpack.c.l.b16 %v580
  %v619 = vunpack.c.l.b16 %v581
  %v620 = vunpack.c.l.b16 %v582
  %v621 = vunpack.c.l.b16 %v583
  %v622 = vunpack.c.l.b16 %v584
  %v623 = vunpack.c.l.b16 %v585
  %v624 = vunpack.c.l.b16 %v586
  %v625 = vunpack.c.l.b16 %v587
  %v626 = vunpack.c.l.b16 %v588
  %v627 = vunpack.c.l.b16 %v589
  %v628 = vunpack.c.l.b16 %v590
  %v629 = vpack.c.b16 %v614, %v613
  %v630 = vpack.c.b16 %v616, %v615
  %v631 = vpack.c.b16 %v618, %v617
  %v632 = vpack.c.b16 %v620, %v619
  %v633 = vpack.c.b16 %v622, %v621
  %v634 = vpack.c.b16 %v624, %v623
  %v635 = vpack.c.b16 %v626, %v625
  %v636 = vpack.c.b16 %v628, %v627
  %645 = vmatprep.subr.bf16.mxu0 0
  %646 = vmatpush1.bf16.msra.mxu0 %v629
  %647 = vmatprep.subr.bf16.mxu0 0
  %648 = vmatpush1.bf16.msra.mxu0 %v630
  %649 = vmatprep.subr.bf16.mxu0 0
  %650 = vmatpush1.bf16.msra.mxu0 %v631
  %651 = vmatprep.subr.bf16.mxu0 0
  %652 = vmatpush1.bf16.msra.mxu0 %v632
  %653 = vmatprep.subr.bf16.mxu0 0
  %654 = vmatpush1.bf16.msra.mxu0 %v633
  %655 = vmatprep.subr.bf16.mxu0 0
  %656 = vmatpush1.bf16.msra.mxu0 %v634
  %657 = vmatprep.subr.bf16.mxu0 0
  %658 = vmatpush1.bf16.msra.mxu0 %v635
  %659 = vmatprep.subr.bf16.mxu0 0
  %660 = vmatpush1.bf16.msra.mxu0 %v636
  %661 = vmatprep.subr.bf16.mxu0 0
  %662 = vmatpush1.bf16.msra.mxu0 0
  %663 = vmatprep.subr.bf16.mxu0 0
  %664 = vmatpush1.bf16.msra.mxu0 0
  %665 = vmatprep.subr.bf16.mxu0 0
  %666 = vmatpush1.bf16.msra.mxu0 0
  %667 = vmatprep.subr.bf16.mxu0 0
  %668 = vmatpush1.bf16.msra.mxu0 0
  %669 = vmatprep.subr.bf16.mxu0 0
  %670 = vmatpush1.bf16.msra.mxu0 0
  %671 = vmatprep.subr.bf16.mxu0 0
  %672 = vmatpush1.bf16.msra.mxu0 0
  %673 = vmatprep.subr.bf16.mxu0 0
  %674 = vmatpush1.bf16.msra.mxu0 0
  %675 = vmatprep.subr.bf16.mxu0 0
  %676 = vmatpush1.bf16.msra.mxu0 0
  %677 = vmatprep.mubr.bf16.mxu0 0
  %678 = vmatmul.mubr.bf16.gmra.mrb[0].mxu0 %v592
  %v679 = vpop.f32.mrb[0].mxu0
  %v680 = vadd.f32 %v596, %v679
  %v681 = vpop.f32.mrb[0].mxu0
  %v682 = vpop.f32.mrb[0].mxu0
  %v683 = vpop.f32.mrb[0].mxu0
  %684 = vdwg.mxu0
  %685 = vst [vmem:[%s3] sm:$0xff] %v680
  // Predicated region
  $region14: #{mlp_5_layer_forward.1} parent=0 // pred_check
    _
  $region15: #{mlp_5_layer_forward.1} parent=0 // pred_check_branch
    %687 = sbr.rel (0) target = $region17
  $region16: #{mlp_5_layer_forward.1} parent=0 // pred_region
    _
  $region17: #{mlp_5_layer_forward.1} parent=0 // pred_fallthru
    _
  // Predicated region
  $region18: #{mlp_5_layer_forward.1} parent=0 // pred_check
    _
  $region19: #{mlp_5_layer_forward.1} parent=0 // pred_check_branch
    %689 = sbr.rel (0) target = $region21
  $region20: #{mlp_5_layer_forward.1} parent=0 // pred_region
    _
  $region21: #{mlp_5_layer_forward.1} parent=0 // pred_fallthru
    _

</llo_original>
